<compile_context>
chip_gen: v6e
topology: v6e:2x2x1
jax: 0.10.0
libtpu: 0.0.40
codegen_flags: <defaults>
</compile_context>

<pallas_src>
import jax
import jax.numpy as jnp
from jax.experimental import pallas as pl
from jax.experimental.pallas import tpu as pltpu


def _round_up(n, m):
    return ((n + m - 1) // m) * m


def _has_bf16_vector_units():
    """True on v6e/v7x-class chips (bf16 VPU/EUP); False on v5e and older."""
    try:
        kind = jax.devices()[0].device_kind.lower()
    except Exception:
        return False
    return any(tag in kind for tag in ("v6", "v7", "7x", "trillium"))


def _actor_kernel(x_t_ref, w1_ref, b1_ref, w2_ref, b2_ref, wm_ref, bm_ref,
                  mean_t_ref):
    """3-layer tanh MLP on a transposed (feature, batch) tile.

    All operands arrive already in their compute dtype (cast once in the
    wrapper), so there is no per-grid-step re-cast of the resident weights and
    no in-kernel transpose: batch is on the lane axis end-to-end (lane-dense
    loads, MXU dots, bias/tanh, and unmasked full-width stores).
    """
    act_dtype = x_t_ref.dtype
    # Layer 1: (64, S) @ (S, TB) -> (64, TB); f32 MXU accumulate.
    h1 = jnp.tanh(
        jnp.dot(w1_ref[...], x_t_ref[...],
                preferred_element_type=jnp.float32).astype(act_dtype)
        + b1_ref[...])
    # Layer 2: (32, 64) @ (64, TB) -> (32, TB).
    h2 = jnp.tanh(
        jnp.dot(w2_ref[...], h1,
                preferred_element_type=jnp.float32).astype(act_dtype)
        + b2_ref[...])
    # Mean head: (A, 32) @ (32, TB) -> (A, TB), lane-dense output.
    mean_t = jnp.tanh(
        jnp.dot(wm_ref[...], h2,
                preferred_element_type=jnp.float32).astype(act_dtype)
        + bm_ref[...])
    mean_t_ref[...] = mean_t.astype(mean_t_ref.dtype)


def actor_forward(x, params, *, use_bf16=False, max_tb=4096):
    """x: (batch, state_dim), (state_dim,), or a Python list. Returns (mean, std)."""
    w1, b1, w2, b2, wm, bm, log_std = params
    x = jnp.asarray(x, jnp.float32)          # mirrors from_list(...)
    if x.ndim == 1:                          # mirrors state.unsqueeze(0)
        x = x[None, :]
    batch, state_dim = x.shape
    action_dim = wm.shape[0]

    # bf16 activations only help where VPU/EUP are bf16-capable (v6e/v7x);
    # keep the f32 path on v5e (caller gates via `use_bf16`).
    compute_dtype = jnp.bfloat16 if use_bf16 else jnp.float32
    itemsize = 2 if use_bf16 else 4

    # Adaptive batch tile: as few, as large, lane-aligned steps as possible.
    num_steps = int(pl.cdiv(batch, max_tb))
    tb = _round_up(-(-batch // num_steps), 128)     # multiple of 128 lanes
    padded_batch = num_steps * tb
    grid = (num_steps,)

    # Present x TRANSPOSED: (state_dim, padded_batch), batch on the lane axis.
    # One cheap XLA transpose+pad pass over a few hundred KB replaces the
    # per-step in-kernel XLU transpose and the lane-sparse input blocks.
    x_t = jnp.pad(x.astype(compute_dtype).T,
                  ((0, 0), (0, padded_batch - batch)))

    # Cast weights/biases to the compute dtype ONCE (not per grid step).
    w1c, b1c, w2c, b2c, wmc, bmc = (
        a.astype(compute_dtype) for a in (w1, b1, w2, b2, wm, bm))

    def resident(a):
        # Full-array block, constant index_map -> fetched once, VMEM-resident.
        return pl.BlockSpec(a.shape, lambda i: (0,) * a.ndim)

    weight_bytes = sum(int(a.size) for a in (w1c, b1c, w2c, b2c, wmc, bmc)) * itemsize
    cost = pl.CostEstimate(
        flops=2 * padded_batch * (state_dim * 64 + 64 * 32 + 32 * action_dim),
        transcendentals=padded_batch * (64 + 32 + action_dim),
        bytes_accessed=(state_dim * padded_batch * itemsize      # x stream in
                        + action_dim * padded_batch * 4          # mean out (f32)
                        + weight_bytes),
    )

    mean_t = pl.pallas_call(
        _actor_kernel,
        out_shape=jax.ShapeDtypeStruct((action_dim, padded_batch), jnp.float32),
        grid=grid,
        in_specs=[
            # x tile: lane-dense (state_dim, tb), pipelined over the batch axis.
            pl.BlockSpec((state_dim, tb), lambda i: (0, i)),
            resident(w1c), resident(b1c),
            resident(w2c), resident(b2c),
            resident(wmc), resident(bmc),
        ],
        out_specs=pl.BlockSpec((action_dim, tb), lambda i: (0, i)),
        compiler_params=pltpu.CompilerParams(
            # Batch axis is embarrassingly parallel; with grid >= 2 the two v7x
            # TensorCores can split it.  Harmless on single-TC v5e/v6e.
            dimension_semantics=("parallel",),
        ),
        cost_estimate=cost,
    )(x_t, w1c, b1c, w2c, b2c, wmc, bmc)

    mean = mean_t[:, :batch].T                       # -> (batch, action_dim)
    # std = exp(log_std) is x-independent: lazy broadcast outside the kernel.
    std = jnp.broadcast_to(jnp.exp(log_std), mean.shape)
    return mean, std


def init_params(key, state_dim, action_dim):
    """Deterministic synthetic init mimicking nn.Linear (PyTorch (out,in) layout)."""
    ks = jax.random.split(key, 6)

    def linear(kw, kb, fan_in, fan_out):
        bound = 1.0 / (fan_in ** 0.5)
        w = jax.random.uniform(kw, (fan_out, fan_in), jnp.float32, -bound, bound)
        b = jax.random.uniform(kb, (fan_out, 1), jnp.float32, -bound, bound)
        return w, b

    w1, b1 = linear(ks[0], ks[1], state_dim, 64)
    w2, b2 = linear(ks[2], ks[3], 64, 32)
    wm, bm = linear(ks[4], ks[5], 32, action_dim)
    log_std = jnp.zeros((action_dim,), jnp.float32)   # nn.Parameter(zeros)
    return (w1, b1, w2, b2, wm, bm, log_std)


def actor_reference(x, params):
    w1, b1, w2, b2, wm, bm, log_std = params
    x = jnp.asarray(x, jnp.float32)
    if x.ndim == 1:
        x = x[None, :]
    h1 = jnp.tanh(x @ w1.T + b1[:, 0])
    h2 = jnp.tanh(h1 @ w2.T + b2[:, 0])
    mean = jnp.tanh(h2 @ wm.T + bm[:, 0])
    std = jnp.broadcast_to(jnp.exp(log_std), mean.shape)
    return mean, std


if __name__ == "__main__":
    key = jax.random.PRNGKey(0)
    k_param, k_x, k_xb, k_xh = jax.random.split(key, 4)

    batch, state_dim, action_dim = 8, 16, 4
    params = init_params(k_param, state_dim, action_dim)

    # --- small batch, f32 path (single grid step) ---
    x = jax.random.normal(k_x, (batch, state_dim), jnp.float32)
    mean, std = actor_forward(x, params)
    jax.block_until_ready((mean, std))
    mean_ref, std_ref = actor_reference(x, params)
    assert mean.shape == (batch, action_dim) and std.shape == (batch, action_dim)
    assert jnp.allclose(mean, mean_ref, atol=5e-3, rtol=5e-3), \
        float(jnp.max(jnp.abs(mean - mean_ref)))
    assert jnp.allclose(std, std_ref, atol=1e-6, rtol=1e-6)

    # --- 1-D state (mirrors state.unsqueeze(0)) ---
    mean1, std1 = actor_forward(x[0], params)
    jax.block_until_ready((mean1, std1))
    mean1_ref, _ = actor_reference(x[0], params)
    assert mean1.shape == (1, action_dim)
    assert jnp.allclose(mean1, mean1_ref, atol=5e-3, rtol=5e-3)

    # --- medium batch: non-multiple-of-128, still one adaptive grid step ---
    med_batch = 2500
    xb = jax.random.normal(k_xb, (med_batch, state_dim), jnp.float32)
    mean_b, std_b = actor_forward(xb, params)
    jax.block_until_ready((mean_b, std_b))
    mean_b_ref, std_b_ref = actor_reference(xb, params)
    assert mean_b.shape == (med_batch, action_dim)
    assert jnp.allclose(mean_b, mean_b_ref, atol=5e-3, rtol=5e-3), \
        float(jnp.max(jnp.abs(mean_b - mean_b_ref)))
    assert jnp.allclose(std_b, std_b_ref, atol=1e-6, rtol=1e-6)

    # --- large batch: exercises grid > 1, padding, pipelined x tiles ---
    big_batch = 10000
    xh = jax.random.normal(k_xh, (big_batch, state_dim), jnp.float32)
    mean_h, std_h = actor_forward(xh, params)
    jax.block_until_ready((mean_h, std_h))
    mean_h_ref, std_h_ref = actor_reference(xh, params)
    assert mean_h.shape == (big_batch, action_dim)
    assert jnp.allclose(mean_h, mean_h_ref, atol=5e-3, rtol=5e-3), \
        float(jnp.max(jnp.abs(mean_h - mean_h_ref)))
    assert jnp.allclose(std_h, std_h_ref, atol=1e-6, rtol=1e-6)

    # --- bf16 activation fast path: only where VPU/EUP are bf16 (v6e/v7x) ---
    if _has_bf16_vector_units():
        mean_l, std_l = actor_forward(xb, params, use_bf16=True)
        jax.block_until_ready((mean_l, std_l))
        err = jnp.abs(mean_l - mean_b_ref)
        assert float(jnp.max(err)) < 0.1, float(jnp.max(err))
        assert float(jnp.mean(err)) < 0.02, float(jnp.mean(err))
        assert jnp.allclose(std_l, std_b_ref, atol=1e-6, rtol=1e-6)

    print("KERNEL_OK")
</pallas_src>

<mosaic_0001>
module attributes {stable_mosaic.version = 11 : i64} {
  func.func @_actor_kernel(%arg0: i32, %arg1: memref<16x128xf32, #tpu.memory_space<vmem>>, %arg2: memref<64x16xf32, #tpu.memory_space<vmem>>, %arg3: memref<64x1xf32, #tpu.memory_space<vmem>>, %arg4: memref<32x64xf32, #tpu.memory_space<vmem>>, %arg5: memref<32x1xf32, #tpu.memory_space<vmem>>, %arg6: memref<4x32xf32, #tpu.memory_space<vmem>>, %arg7: memref<4x1xf32, #tpu.memory_space<vmem>>, %arg8: memref<4x128xf32, #tpu.memory_space<vmem>>) attributes {dimension_semantics = [#tpu.dimension_semantics<parallel>], iteration_bounds = array<i64: 1>, scalar_prefetch = 0 : i64, scratch_operands = 0 : i64, tpu.core_type = #tpu.core_type<tc>, window_params = [{transform_indices = @transform_0, window_bounds = array<i64: 16, 128>}, {pipeline_mode = #tpu.pipeline_mode<synchronous>, transform_indices = @transform_1, window_bounds = array<i64: 64, 16>}, {pipeline_mode = #tpu.pipeline_mode<synchronous>, transform_indices = @transform_2, window_bounds = array<i64: 64, 1>}, {pipeline_mode = #tpu.pipeline_mode<synchronous>, transform_indices = @transform_3, window_bounds = array<i64: 32, 64>}, {pipeline_mode = #tpu.pipeline_mode<synchronous>, transform_indices = @transform_4, window_bounds = array<i64: 32, 1>}, {pipeline_mode = #tpu.pipeline_mode<synchronous>, transform_indices = @transform_5, window_bounds = array<i64: 4, 32>}, {pipeline_mode = #tpu.pipeline_mode<synchronous>, transform_indices = @transform_6, window_bounds = array<i64: 4, 1>}, {transform_indices = @transform_7, window_bounds = array<i64: 4, 128>}]} {
    %c0 = arith.constant 0 : index
    %c0_0 = arith.constant 0 : index
    %0 = vector.load %arg2[%c0, %c0_0] : memref<64x16xf32, #tpu.memory_space<vmem>>, vector<64x16xf32>
    %c0_1 = arith.constant 0 : index
    %c0_2 = arith.constant 0 : index
    %1 = vector.load %arg1[%c0_1, %c0_2] : memref<16x128xf32, #tpu.memory_space<vmem>>, vector<16x128xf32>
    %cst = arith.constant dense<0.000000e+00> : vector<64x128xf32>
    %2 = tpu.matmul %0, %1, %cst {dimension_numbers = #tpu.dot_dimension_numbers<[1], [0], [0], [1], [0, 0, 1, 1], [], []>} : vector<64x16xf32>, vector<16x128xf32>, vector<64x128xf32> -> vector<64x128xf32>
    %c0_3 = arith.constant 0 : index
    %c0_4 = arith.constant 0 : index
    %3 = vector.load %arg3[%c0_3, %c0_4] : memref<64x1xf32, #tpu.memory_space<vmem>>, vector<64x1xf32>
    %4 = vector.broadcast %3 : vector<64x1xf32> to vector<64x128xf32>
    %5 = arith.addf %2, %4 : vector<64x128xf32>
    %6 = math.tanh %5 : vector<64x128xf32>
    %c0_5 = arith.constant 0 : index
    %c0_6 = arith.constant 0 : index
    %7 = vector.load %arg4[%c0_5, %c0_6] : memref<32x64xf32, #tpu.memory_space<vmem>>, vector<32x64xf32>
    %cst_7 = arith.constant dense<0.000000e+00> : vector<32x128xf32>
    %8 = tpu.matmul %7, %6, %cst_7 {dimension_numbers = #tpu.dot_dimension_numbers<[1], [0], [0], [1], [0, 0, 1, 1], [], []>} : vector<32x64xf32>, vector<64x128xf32>, vector<32x128xf32> -> vector<32x128xf32>
    %c0_8 = arith.constant 0 : index
    %c0_9 = arith.constant 0 : index
    %9 = vector.load %arg5[%c0_8, %c0_9] : memref<32x1xf32, #tpu.memory_space<vmem>>, vector<32x1xf32>
    %10 = vector.broadcast %9 : vector<32x1xf32> to vector<32x128xf32>
    %11 = arith.addf %8, %10 : vector<32x128xf32>
    %12 = math.tanh %11 : vector<32x128xf32>
    %c0_10 = arith.constant 0 : index
    %c0_11 = arith.constant 0 : index
    %13 = vector.load %arg6[%c0_10, %c0_11] : memref<4x32xf32, #tpu.memory_space<vmem>>, vector<4x32xf32>
    %cst_12 = arith.constant dense<0.000000e+00> : vector<4x128xf32>
    %14 = tpu.matmul %13, %12, %cst_12 {dimension_numbers = #tpu.dot_dimension_numbers<[1], [0], [0], [1], [0, 0, 1, 1], [], []>} : vector<4x32xf32>, vector<32x128xf32>, vector<4x128xf32> -> vector<4x128xf32>
    %c0_13 = arith.constant 0 : index
    %c0_14 = arith.constant 0 : index
    %15 = vector.load %arg7[%c0_13, %c0_14] : memref<4x1xf32, #tpu.memory_space<vmem>>, vector<4x1xf32>
    %16 = vector.broadcast %15 : vector<4x1xf32> to vector<4x128xf32>
    %17 = arith.addf %14, %16 : vector<4x128xf32>
    %18 = math.tanh %17 : vector<4x128xf32>
    %c0_15 = arith.constant 0 : index
    %c0_16 = arith.constant 0 : index
    %19 = vector.load %arg8[%c0_15, %c0_16] : memref<4x128xf32, #tpu.memory_space<vmem>>, vector<4x128xf32>
    tpu.vector_store %arg8[%c0_15, %c0_16], %18 {strides = array<i32>} : memref<4x128xf32, #tpu.memory_space<vmem>>, vector<4x128xf32>,
    return
  }
  func.func @transform_0(%arg0: i32) -> (i32, i32) {
    %c0_i32 = arith.constant 0 : i32
    %c0_i32_0 = arith.constant 0 : i32
    return %c0_i32, %arg0 : i32, i32
  }
  func.func @transform_1(%arg0: i32) -> (i32, i32) {
    %c0_i32 = arith.constant 0 : i32
    %c0_i32_0 = arith.constant 0 : i32
    %c0_i32_1 = arith.constant 0 : i32
    return %c0_i32, %c0_i32_0 : i32, i32
  }
  func.func @transform_2(%arg0: i32) -> (i32, i32) {
    %c0_i32 = arith.constant 0 : i32
    %c0_i32_0 = arith.constant 0 : i32
    %c0_i32_1 = arith.constant 0 : i32
    return %c0_i32, %c0_i32_0 : i32, i32
  }
  func.func @transform_3(%arg0: i32) -> (i32, i32) {
    %c0_i32 = arith.constant 0 : i32
    %c0_i32_0 = arith.constant 0 : i32
    %c0_i32_1 = arith.constant 0 : i32
    return %c0_i32, %c0_i32_0 : i32, i32
  }
  func.func @transform_4(%arg0: i32) -> (i32, i32) {
    %c0_i32 = arith.constant 0 : i32
    %c0_i32_0 = arith.constant 0 : i32
    %c0_i32_1 = arith.constant 0 : i32
    return %c0_i32, %c0_i32_0 : i32, i32
  }
  func.func @transform_5(%arg0: i32) -> (i32, i32) {
    %c0_i32 = arith.constant 0 : i32
    %c0_i32_0 = arith.constant 0 : i32
    %c0_i32_1 = arith.constant 0 : i32
    return %c0_i32, %c0_i32_0 : i32, i32
  }
  func.func @transform_6(%arg0: i32) -> (i32, i32) {
    %c0_i32 = arith.constant 0 : i32
    %c0_i32_0 = arith.constant 0 : i32
    %c0_i32_1 = arith.constant 0 : i32
    return %c0_i32, %c0_i32_0 : i32, i32
  }
  func.func @transform_7(%arg0: i32) -> (i32, i32) {
    %c0_i32 = arith.constant 0 : i32
    %c0_i32_0 = arith.constant 0 : i32
    return %c0_i32, %arg0 : i32, i32
  }
}

</mosaic_0001>

<llo_original>
// kernel: tpu_custom_call.1
$region0: #{tpu_custom_call.1}
  #allocation0 [shape = 'u32[]', space=smem, size = 0x4, offset = 0x4, fixed_abs, tag = 'smem constant byte address 0x4 - core index']
  #allocation1 [shape = 'u32[144,128]{1,0:T(1,128)}', space=vmem, size = 0x12000, scoped, tag = 'internal scratch']
  %s0 = inlined_call_operand.vmem [shape: f32[16,128], index: 0, kind: input, shape index: {}]
  %s1 = inlined_call_operand.vmem [shape: f32[64,16], index: 1, kind: input, shape index: {}]
  %s2 = inlined_call_operand.vmem [shape: f32[64,1], index: 2, kind: input, shape index: {}]
  %s3 = inlined_call_operand.vmem [shape: f32[32,64], index: 3, kind: input, shape index: {}]
  %s4 = inlined_call_operand.vmem [shape: f32[32,1], index: 4, kind: input, shape index: {}]
  %s5 = inlined_call_operand.vmem [shape: f32[4,32], index: 5, kind: input, shape index: {}]
  %s6 = inlined_call_operand.vmem [shape: f32[4,1], index: 6, kind: input, shape index: {}]
  %s7 = inlined_call_operand.hbm [shape: f32[4,128], index: 7, kind: output, shape index: {}]
  %s8 = sld [smem:[#allocation0]]
  $region38: #{tpu_custom_call.1} parent=0
    _
  %s10 = ssub.s32 1, %s8
  %s11 = scalar_select 0, %s10, %s8
  $region1: #{tpu_custom_call.1} parent=0
    #allocation2 [shape = 'u8[2048]{0}', space=vmem, size = 0x800, scoped, tag = 'output window, operand 0, single buffered']
    #allocation3 [shape = 's32[1]{0}', space=sflag, size = 0x4, scoped, tag = 'scoped memory for tpu_custom_call.1']
    %12 = vsyncpa [#allocation3], 0
    // Predicated region
    $region2: #{tpu_custom_call.1} parent=1 // pred_check
      _
    $region3: #{tpu_custom_call.1} parent=1 // pred_check_branch
      %14 = sbr.rel (0) target = $region5
    $region4: #{tpu_custom_call.1} parent=1 // pred_region
      _
    $region5: #{tpu_custom_call.1} parent=1 // pred_fallthru
      _
    // Predicated region
    $region6: #{tpu_custom_call.1} parent=1 // pred_check
      _
    $region7: #{tpu_custom_call.1} parent=1 // pred_check_branch
      %16 = sbr.rel (0) target = $region9
    $region8: #{tpu_custom_call.1} parent=1 // pred_region
      _
    $region9: #{tpu_custom_call.1} parent=1 // pred_fallthru
      _
    // Predicated region
    $region10: #{tpu_custom_call.1} parent=1 // pred_check
      _
    $region11: #{tpu_custom_call.1} parent=1 // pred_check_branch
      %18 = sbr.rel (0) target = $region13
    $region12: #{tpu_custom_call.1} parent=1 // pred_region
      _
    $region13: #{tpu_custom_call.1} parent=1 // pred_fallthru
      _
    // Predicated region
    $region14: #{tpu_custom_call.1} parent=1 // pred_check
      _
    $region15: #{tpu_custom_call.1} parent=1 // pred_check_branch
      %20 = sbr.rel (0) target = $region17
    $region16: #{tpu_custom_call.1} parent=1 // pred_region
      _
    $region17: #{tpu_custom_call.1} parent=1 // pred_fallthru
      _
    // Predicated region
    $region18: #{tpu_custom_call.1} parent=1 // pred_check
      _
    $region19: #{tpu_custom_call.1} parent=1 // pred_check_branch
      %22 = sbr.rel (0) target = $region21
    $region20: #{tpu_custom_call.1} parent=1 // pred_region
      _
    $region21: #{tpu_custom_call.1} parent=1 // pred_fallthru
      _
    // Predicated region
    $region22: #{tpu_custom_call.1} parent=1 // pred_check
      _
    $region23: #{tpu_custom_call.1} parent=1 // pred_check_branch
      %24 = sbr.rel (0) target = $region25
    $region24: #{tpu_custom_call.1} parent=1 // pred_region
      _
    $region25: #{tpu_custom_call.1} parent=1 // pred_fallthru
      _
    // Predicated region
    $region26: #{tpu_custom_call.1} parent=1 // pred_check
      _
    $region27: #{tpu_custom_call.1} parent=1 // pred_check_branch
      %26 = sbr.rel (0) target = $region29
    $region28: #{tpu_custom_call.1} parent=1 // pred_region
      _
    $region29: #{tpu_custom_call.1} parent=1 // pred_fallthru
      _
    %v27 = vld [vmem:[%s1] sm:$0xff]
    %v28 = vld [vmem:[%s1 + $0x8] sm:$0xff]
    %v29 = vld [vmem:[%s1 + $0x10] sm:$0xff]
    %v30 = vld [vmem:[%s1 + $0x18] sm:$0xff]
    %v31 = vld [vmem:[%s1 + $0x20] sm:$0xff]
    %v32 = vld [vmem:[%s1 + $0x28] sm:$0xff]
    %v33 = vld [vmem:[%s1 + $0x30] sm:$0xff]
    %v34 = vld [vmem:[%s1 + $0x38] sm:$0xff]
    %v35 = vld [vmem:[%s0] sm:$0xff]
    %v36 = vld [vmem:[%s0 + $0x8] sm:$0xff]
    %v37 = vld [vmem:[%s2] sm:$0xff]
    %v38 = vld [vmem:[%s2 + $0x8] sm:$0xff]
    %v39 = vld [vmem:[%s2 + $0x10] sm:$0xff]
    %v40 = vld [vmem:[%s2 + $0x18] sm:$0xff]
    %v41 = vld [vmem:[%s2 + $0x20] sm:$0xff]
    %v42 = vld [vmem:[%s2 + $0x28] sm:$0xff]
    %v43 = vld [vmem:[%s2 + $0x30] sm:$0xff]
    %v44 = vld [vmem:[%s2 + $0x38] sm:$0xff]
    %46 = vset.pattern.permute.xlu0 0
    %47 = vperm.xlu0 %46, %v37
    %v48 = vpop.permute.xlu0 %47
    %51 = vset.pattern.permute.xlu0 0
    %52 = vperm.xlu0 %51, %v38
    %v53 = vpop.permute.xlu0 %52
    %56 = vset.pattern.permute.xlu0 0
    %57 = vperm.xlu0 %56, %v39
    %v58 = vpop.permute.xlu0 %57
    %61 = vset.pattern.permute.xlu0 0
    %62 = vperm.xlu0 %61, %v40
    %v63 = vpop.permute.xlu0 %62
    %66 = vset.pattern.permute.xlu0 0
    %67 = vperm.xlu0 %66, %v41
    %v68 = vpop.permute.xlu0 %67
    %71 = vset.pattern.permute.xlu0 0
    %72 = vperm.xlu0 %71, %v42
    %v73 = vpop.permute.xlu0 %72
    %76 = vset.pattern.permute.xlu0 0
    %77 = vperm.xlu0 %76, %v43
    %v78 = vpop.permute.xlu0 %77
    %81 = vset.pattern.permute.xlu0 0
    %82 = vperm.xlu0 %81, %v44
    %v83 = vpop.permute.xlu0 %82
    %vm85 = vcmask 130048
    %v87 = vsel %vm85, %v27, 0
    %v90 = vsel %vm85, %v28, 0
    %v93 = vsel %vm85, %v29, 0
    %v96 = vsel %vm85, %v30, 0
    %v99 = vsel %vm85, %v31, 0
    %v102 = vsel %vm85, %v32, 0
    %v105 = vsel %vm85, %v33, 0
    %v108 = vsel %vm85, %v34, 0
    %110 = vmatprep.subr.mxu0 0.0
    %111 = vmatpush1.msra.mxu0 0.0
    %112 = vmatprep.subr.mxu0 0.0
    %113 = vmatpush1.msra.mxu0 0.0
    %114 = vmatprep.subr.mxu0 0.0
    %115 = vmatpush1.msra.mxu0 0.0
    %116 = vmatprep.subr.mxu0 0.0
    %117 = vmatpush1.msra.mxu0 0.0
    %118 = vmatprep.subr.mxu0 0.0
    %119 = vmatpush1.msra.mxu0 0.0
    %120 = vmatprep.subr.mxu0 0.0
    %121 = vmatpush1.msra.mxu0 0.0
    %122 = vmatprep.subr.mxu0 0.0
    %123 = vmatpush1.msra.mxu0 0.0
    %124 = vmatprep.subr.mxu0 0.0
    %125 = vmatpush1.msra.mxu0 0.0
    %126 = vmatprep.subr.mxu0 0.0
    %127 = vmatpush1.msra.mxu0 0.0
    %128 = vmatprep.subr.mxu0 0.0
    %129 = vmatpush1.msra.mxu0 0.0
    %130 = vmatprep.subr.mxu0 0.0
    %131 = vmatpush1.msra.mxu0 0.0
    %132 = vmatprep.subr.mxu0 0.0
    %133 = vmatpush1.msra.mxu0 0.0
    %134 = vmatprep.subr.mxu0 0.0
    %135 = vmatpush1.msra.mxu0 0.0
    %136 = vmatprep.subr.mxu0 0.0
    %137 = vmatpush1.msra.mxu0 0.0
    %138 = vmatprep.subr.mxu0 0.0
    %139 = vmatpush1.msra.mxu0 %v36
    %140 = vmatprep.subr.mxu0 0.0
    %141 = vmatpush1.msra.mxu0 %v35
    %142 = vmatprep.subr.mxu0 0.0
    %143 = vmatpush2.msra.mxu0 0.0
    %144 = vmatprep.subr.mxu0 0.0
    %145 = vmatpush2.msra.mxu0 0.0
    %146 = vmatprep.subr.mxu0 0.0
    %147 = vmatpush2.msra.mxu0 0.0
    %148 = vmatprep.subr.mxu0 0.0
    %149 = vmatpush2.msra.mxu0 0.0
    %150 = vmatprep.subr.mxu0 0.0
    %151 = vmatpush2.msra.mxu0 0.0
    %152 = vmatprep.subr.mxu0 0.0
    %153 = vmatpush2.msra.mxu0 0.0
    %154 = vmatprep.subr.mxu0 0.0
    %155 = vmatpush2.msra.mxu0 0.0
    %156 = vmatprep.subr.mxu0 0.0
    %157 = vmatpush2.msra.mxu0 0.0
    %158 = vmatprep.subr.mxu0 0.0
    %159 = vmatpush2.msra.mxu0 0.0
    %160 = vmatprep.subr.mxu0 0.0
    %161 = vmatpush2.msra.mxu0 0.0
    %162 = vmatprep.subr.mxu0 0.0
    %163 = vmatpush2.msra.mxu0 0.0
    %164 = vmatprep.subr.mxu0 0.0
    %165 = vmatpush2.msra.mxu0 0.0
    %166 = vmatprep.subr.mxu0 0.0
    %167 = vmatpush2.msra.mxu0 0.0
    %168 = vmatprep.subr.mxu0 0.0
    %169 = vmatpush2.msra.mxu0 0.0
    %170 = vmatprep.subr.mxu0 0.0
    %171 = vmatpush2.msra.mxu0 0.0
    %172 = vmatprep.subr.mxu0 0.0
    %173 = vmatpush2.msra.mxu0 0.0
    %174 = vmatprep.mubr.f32.mxu0 0.0
    %175 = vmatmul.mubr.f32.gmra.mxu0 %v87
    %v176 = vpop.f32.mrf.mxu0
    %v177 = vadd.f32 %v48, %v176
    %v178 = vpop.f32.mrf.mxu0
    %179 = vmatprep.mubr.f32.mxu0 0.0
    %180 = vmatmul.mubr.f32.gmra.mxu0 %v90
    %v181 = vpop.f32.mrf.mxu0
    %v182 = vadd.f32 %v53, %v181
    %v183 = vpop.f32.mrf.mxu0
    %184 = vmatprep.mubr.f32.mxu0 0.0
    %185 = vmatmul.mubr.f32.gmra.mxu0 %v93
    %v186 = vpop.f32.mrf.mxu0
    %v187 = vadd.f32 %v58, %v186
    %v188 = vpop.f32.mrf.mxu0
    %189 = vmatprep.mubr.f32.mxu0 0.0
    %190 = vmatmul.mubr.f32.gmra.mxu0 %v96
    %v191 = vpop.f32.mrf.mxu0
    %v192 = vadd.f32 %v63, %v191
    %v193 = vpop.f32.mrf.mxu0
    %194 = vmatprep.mubr.f32.mxu0 0.0
    %195 = vmatmul.mubr.f32.gmra.mxu0 %v99
    %v196 = vpop.f32.mrf.mxu0
    %v197 = vadd.f32 %v68, %v196
    %v198 = vpop.f32.mrf.mxu0
    %199 = vmatprep.mubr.f32.mxu0 0.0
    %200 = vmatmul.mubr.f32.gmra.mxu0 %v102
    %v201 = vpop.f32.mrf.mxu0
    %v202 = vadd.f32 %v73, %v201
    %v203 = vpop.f32.mrf.mxu0
    %204 = vmatprep.mubr.f32.mxu0 0.0
    %205 = vmatmul.mubr.f32.gmra.mxu0 %v105
    %v206 = vpop.f32.mrf.mxu0
    %v207 = vadd.f32 %v78, %v206
    %v208 = vpop.f32.mrf.mxu0
    %209 = vmatprep.mubr.f32.mxu0 0.0
    %210 = vmatmul.mubr.f32.gmra.mxu0 %v108
    %v211 = vpop.f32.mrf.mxu0
    %v212 = vadd.f32 %v83, %v211
    %v213 = vpop.f32.mrf.mxu0
    %214 = vdwg.mxu0
    %v215 = vtanh.pop %v177
    %v216 = vtanh.pop %v182
    %v217 = vtanh.pop %v187
    %v218 = vtanh.pop %v192
    %v219 = vtanh.pop %v197
    %v220 = vtanh.pop %v202
    %v221 = vtanh.pop %v207
    %v222 = vtanh.pop %v212
    %v223 = vld [vmem:[%s3] sm:$0xff]
    %v224 = vld [vmem:[%s3 + $0x8] sm:$0xff]
    %v225 = vld [vmem:[%s3 + $0x10] sm:$0xff]
    %v226 = vld [vmem:[%s3 + $0x18] sm:$0xff]
    %v227 = vld [vmem:[%s4] sm:$0xff]
    %v228 = vld [vmem:[%s4 + $0x8] sm:$0xff]
    %v229 = vld [vmem:[%s4 + $0x10] sm:$0xff]
    %v230 = vld [vmem:[%s4 + $0x18] sm:$0xff]
    %232 = vset.pattern.permute.xlu0 0
    %233 = vperm.xlu0 %232, %v227
    %v234 = vpop.permute.xlu0 %233
    %237 = vset.pattern.permute.xlu0 0
    %238 = vperm.xlu0 %237, %v228
    %v239 = vpop.permute.xlu0 %238
    %242 = vset.pattern.permute.xlu0 0
    %243 = vperm.xlu0 %242, %v229
    %v244 = vpop.permute.xlu0 %243
    %247 = vset.pattern.permute.xlu0 0
    %248 = vperm.xlu0 %247, %v230
    %v249 = vpop.permute.xlu0 %248
    %vm251 = vcmask 523264
    %v253 = vsel %vm251, %v223, 0
    %v256 = vsel %vm251, %v224, 0
    %v259 = vsel %vm251, %v225, 0
    %v262 = vsel %vm251, %v226, 0
    %264 = vmatprep.subr.mxu0 0.0
    %265 = vmatpush1.msra.mxu0 0.0
    %266 = vmatprep.subr.mxu0 0.0
    %267 = vmatpush1.msra.mxu0 0.0
    %268 = vmatprep.subr.mxu0 0.0
    %269 = vmatpush1.msra.mxu0 0.0
    %270 = vmatprep.subr.mxu0 0.0
    %271 = vmatpush1.msra.mxu0 0.0
    %272 = vmatprep.subr.mxu0 0.0
    %273 = vmatpush1.msra.mxu0 0.0
    %274 = vmatprep.subr.mxu0 0.0
    %275 = vmatpush1.msra.mxu0 0.0
    %276 = vmatprep.subr.mxu0 0.0
    %277 = vmatpush1.msra.mxu0 0.0
    %278 = vmatprep.subr.mxu0 0.0
    %279 = vmatpush1.msra.mxu0 0.0
    %280 = vmatprep.subr.mxu0 0.0
    %281 = vmatpush1.msra.mxu0 %v222
    %282 = vmatprep.subr.mxu0 0.0
    %283 = vmatpush1.msra.mxu0 %v221
    %284 = vmatprep.subr.mxu0 0.0
    %285 = vmatpush1.msra.mxu0 %v220
    %286 = vmatprep.subr.mxu0 0.0
    %287 = vmatpush1.msra.mxu0 %v219
    %288 = vmatprep.subr.mxu0 0.0
    %289 = vmatpush1.msra.mxu0 %v218
    %290 = vmatprep.subr.mxu0 0.0
    %291 = vmatpush1.msra.mxu0 %v217
    %292 = vmatprep.subr.mxu0 0.0
    %293 = vmatpush1.msra.mxu0 %v216
    %294 = vmatprep.subr.mxu0 0.0
    %295 = vmatpush1.msra.mxu0 %v215
    %296 = vmatprep.subr.mxu0 0.0
    %297 = vmatpush2.msra.mxu0 0.0
    %298 = vmatprep.subr.mxu0 0.0
    %299 = vmatpush2.msra.mxu0 0.0
    %300 = vmatprep.subr.mxu0 0.0
    %301 = vmatpush2.msra.mxu0 0.0
    %302 = vmatprep.subr.mxu0 0.0
    %303 = vmatpush2.msra.mxu0 0.0
    %304 = vmatprep.subr.mxu0 0.0
    %305 = vmatpush2.msra.mxu0 0.0
    %306 = vmatprep.subr.mxu0 0.0
    %307 = vmatpush2.msra.mxu0 0.0
    %308 = vmatprep.subr.mxu0 0.0
    %309 = vmatpush2.msra.mxu0 0.0
    %310 = vmatprep.subr.mxu0 0.0
    %311 = vmatpush2.msra.mxu0 0.0
    %312 = vmatprep.subr.mxu0 0.0
    %313 = vmatpush2.msra.mxu0 0.0
    %314 = vmatprep.subr.mxu0 0.0
    %315 = vmatpush2.msra.mxu0 0.0
    %316 = vmatprep.subr.mxu0 0.0
    %317 = vmatpush2.msra.mxu0 0.0
    %318 = vmatprep.subr.mxu0 0.0
    %319 = vmatpush2.msra.mxu0 0.0
    %320 = vmatprep.subr.mxu0 0.0
    %321 = vmatpush2.msra.mxu0 0.0
    %322 = vmatprep.subr.mxu0 0.0
    %323 = vmatpush2.msra.mxu0 0.0
    %324 = vmatprep.subr.mxu0 0.0
    %325 = vmatpush2.msra.mxu0 0.0
    %326 = vmatprep.subr.mxu0 0.0
    %327 = vmatpush2.msra.mxu0 0.0
    %328 = vmatprep.mubr.f32.mxu0 0.0
    %329 = vmatmul.mubr.f32.gmra.mxu0 %v253
    %v330 = vpop.f32.mrf.mxu0
    %v331 = vadd.f32 %v234, %v330
    %v332 = vpop.f32.mrf.mxu0
    %333 = vmatprep.mubr.f32.mxu0 0.0
    %334 = vmatmul.mubr.f32.gmra.mxu0 %v256
    %v335 = vpop.f32.mrf.mxu0
    %v336 = vadd.f32 %v239, %v335
    %v337 = vpop.f32.mrf.mxu0
    %338 = vmatprep.mubr.f32.mxu0 0.0
    %339 = vmatmul.mubr.f32.gmra.mxu0 %v259
    %v340 = vpop.f32.mrf.mxu0
    %v341 = vadd.f32 %v244, %v340
    %v342 = vpop.f32.mrf.mxu0
    %343 = vmatprep.mubr.f32.mxu0 0.0
    %344 = vmatmul.mubr.f32.gmra.mxu0 %v262
    %v345 = vpop.f32.mrf.mxu0
    %v346 = vadd.f32 %v249, %v345
    %v347 = vpop.f32.mrf.mxu0
    %348 = vdwg.mxu0
    %v349 = vtanh.pop %v331
    %v350 = vtanh.pop %v336
    %v351 = vtanh.pop %v341
    %v352 = vtanh.pop %v346
    %v353 = vld [vmem:[%s5] sm:$0xf]
    %v354 = vld [vmem:[%s6] sm:$0xf]
    %356 = vset.pattern.permute.xlu0 0
    %357 = vperm.xlu0 %356, %v354
    %v358 = vpop.permute.xlu0 %357
    %vm360 = vcmask 261120
    %v362 = vsel %vm360, %v353, 0
    %364 = vmatprep.subr.mxu0 0.0
    %365 = vmatpush1.msra.mxu0 0.0
    %366 = vmatprep.subr.mxu0 0.0
    %367 = vmatpush1.msra.mxu0 0.0
    %368 = vmatprep.subr.mxu0 0.0
    %369 = vmatpush1.msra.mxu0 0.0
    %370 = vmatprep.subr.mxu0 0.0
    %371 = vmatpush1.msra.mxu0 0.0
    %372 = vmatprep.subr.mxu0 0.0
    %373 = vmatpush1.msra.mxu0 0.0
    %374 = vmatprep.subr.mxu0 0.0
    %375 = vmatpush1.msra.mxu0 0.0
    %376 = vmatprep.subr.mxu0 0.0
    %377 = vmatpush1.msra.mxu0 0.0
    %378 = vmatprep.subr.mxu0 0.0
    %379 = vmatpush1.msra.mxu0 0.0
    %380 = vmatprep.subr.mxu0 0.0
    %381 = vmatpush1.msra.mxu0 0.0
    %382 = vmatprep.subr.mxu0 0.0
    %383 = vmatpush1.msra.mxu0 0.0
    %384 = vmatprep.subr.mxu0 0.0
    %385 = vmatpush1.msra.mxu0 0.0
    %386 = vmatprep.subr.mxu0 0.0
    %387 = vmatpush1.msra.mxu0 0.0
    %388 = vmatprep.subr.mxu0 0.0
    %389 = vmatpush1.msra.mxu0 %v352
    %390 = vmatprep.subr.mxu0 0.0
    %391 = vmatpush1.msra.mxu0 %v351
    %392 = vmatprep.subr.mxu0 0.0
    %393 = vmatpush1.msra.mxu0 %v350
    %394 = vmatprep.subr.mxu0 0.0
    %395 = vmatpush1.msra.mxu0 %v349
    %396 = vmatprep.subr.mxu0 0.0
    %397 = vmatpush2.msra.mxu0 0.0
    %398 = vmatprep.subr.mxu0 0.0
    %399 = vmatpush2.msra.mxu0 0.0
    %400 = vmatprep.subr.mxu0 0.0
    %401 = vmatpush2.msra.mxu0 0.0
    %402 = vmatprep.subr.mxu0 0.0
    %403 = vmatpush2.msra.mxu0 0.0
    %404 = vmatprep.subr.mxu0 0.0
    %405 = vmatpush2.msra.mxu0 0.0
    %406 = vmatprep.subr.mxu0 0.0
    %407 = vmatpush2.msra.mxu0 0.0
    %408 = vmatprep.subr.mxu0 0.0
    %409 = vmatpush2.msra.mxu0 0.0
    %410 = vmatprep.subr.mxu0 0.0
    %411 = vmatpush2.msra.mxu0 0.0
    %412 = vmatprep.subr.mxu0 0.0
    %413 = vmatpush2.msra.mxu0 0.0
    %414 = vmatprep.subr.mxu0 0.0
    %415 = vmatpush2.msra.mxu0 0.0
    %416 = vmatprep.subr.mxu0 0.0
    %417 = vmatpush2.msra.mxu0 0.0
    %418 = vmatprep.subr.mxu0 0.0
    %419 = vmatpush2.msra.mxu0 0.0
    %420 = vmatprep.subr.mxu0 0.0
    %421 = vmatpush2.msra.mxu0 0.0
    %422 = vmatprep.subr.mxu0 0.0
    %423 = vmatpush2.msra.mxu0 0.0
    %424 = vmatprep.subr.mxu0 0.0
    %425 = vmatpush2.msra.mxu0 0.0
    %426 = vmatprep.subr.mxu0 0.0
    %427 = vmatpush2.msra.mxu0 0.0
    %428 = vmatprep.mubr.f32.mxu0 0.0
    %429 = vmatmul.mubr.f32.gmra.mxu0 %v362
    %v430 = vpop.f32.mrf.mxu0
    %v431 = vadd.f32 %v358, %v430
    %v432 = vpop.f32.mrf.mxu0
    %433 = vdwg.mxu0
    %v434 = vtanh.pop %v431
    %435 = vst [vmem:[#allocation2] sm:$0xf] %v434
    // Predicated region
    $region30: #{tpu_custom_call.1} parent=1 // pred_check
      _
    $region31: #{tpu_custom_call.1} parent=1 // pred_check_branch
      %437 = sbr.rel (0) target = $region33
    $region32: #{tpu_custom_call.1} parent=1 // pred_region
      %s439 = ssub.s32 64, 64
      %440 = vsyncadd [#allocation3], %s439
      %s442 = sshll.u32 [#allocation2], 4
      %s443 = int_to_ptr.vmem [resolvable:$true] %s442
      %445 = dma.vmem_to_hbm [thread:$0]  %s443, 64, %s7, [#allocation3]
    $region33: #{tpu_custom_call.1} parent=1 // pred_fallthru
      _
    // Predicated region
    $region34: #{tpu_custom_call.1} parent=1 // pred_check
      _
    $region35: #{tpu_custom_call.1} parent=1 // pred_check_branch
      %447 = sbr.rel (0) target = $region37
    $region36: #{tpu_custom_call.1} parent=1 // pred_region
      %448 = dma.done [#allocation3], 64
    $region37: #{tpu_custom_call.1} parent=1 // pred_fallthru
      _
    %449 = vsyncpa [#allocation3], 1

</llo_original>
